<compile_context>
chip_gen: v7x
topology: tpu7x:2x2x1
jax: 0.10.0
libtpu: 0.0.40
codegen_flags: <defaults>
</compile_context>

<pallas_src>
from functools import partial

import jax
import jax.numpy as jnp
from jax.experimental import pallas as pl
from jax.experimental.pallas import tpu as pltpu


def _cdiv(a, b):
    return -(-a // b)


def _round_up(a, b):
    return _cdiv(a, b) * b


def _vmem_capacity_bytes():
    """Physical VMEM of the current chip (per TensorCore), with a safe fallback."""
    try:
        info = pltpu.get_tpu_info()
        cap = getattr(info, "vmem_capacity_bytes", None)
        if cap:
            return int(cap)
    except Exception:
        pass
    return 64 * 1024 * 1024  # conservative: v7x per-TC VMEM


def _tile_rows(B, K, itemsize):
    """Pick (batch-tile rows, vmem_limit_bytes).

    Budget = double-buffered logits tile in its native dtype (2 * itemsize B/elem)
    plus ~8 B/elem of in-kernel f32 temporaries (x cast to f32 and the fused
    exp / weighted-sum operand), against a limit derived from the chip's VMEM.
    """
    vmem_cap = _vmem_capacity_bytes()
    # 32 MiB on v7x (64 MiB/TC), 64 MiB on v5e/v6e (128 MiB physical).
    vmem_limit = min(vmem_cap // 2, 64 * 1024 * 1024)
    k_pad = _round_up(K, 128)
    per_row = (2 * itemsize + 8) * k_pad

    if B <= 8:
        # Single block exactly equal to the full (tiny) array.
        return B, vmem_limit

    budget = (vmem_limit * 3) // 4
    cap = (budget // per_row) // 8 * 8
    cap = min(cap, 1024)
    if cap < 8:
        # Even an 8-row tile blows the budget (vocab-scale K): take 8 rows and
        # raise the explicit limit just enough (capped below physical VMEM).
        # TODO(synk): class-axis grid with online logsumexp for vocab-scale K.
        cap = 8
        needed = 8 * per_row + 8 * 1024 * 1024
        vmem_limit = max(vmem_limit, min(needed, vmem_cap - 4 * 1024 * 1024))

    num_tiles = _cdiv(B, cap)
    if num_tiles == 1:
        num_tiles = 2  # >= 2 grid steps so megacore (v7x) can shard the batch
    tb = _round_up(_cdiv(B, num_tiles), 8)
    tb = max(8, min(tb, (B // 8) * 8))  # keep tb <= B; only the last block is ragged
    return tb, vmem_limit


def _ce_label_smooth_kernel(logits_ref, labels_ref, loss_ref, *, epsilon, num_classes):
    """One batch tile: logits (TB, K), labels (TB, 1) int32, loss (TB, 1) f32."""
    x = logits_ref[...].astype(jnp.float32)                    # (TB, K)
    tb, k = x.shape

    eps = jnp.float32(epsilon)
    kf = jnp.float32(num_classes)
    base = eps / kf

    label = labels_ref[...]                                     # (TB, 1) int32
    col = jax.lax.broadcasted_iota(jnp.int32, (1, k), 1)        # (1, K), broadcast vs label
    # w_k = eps/K + (1-eps)*[k == label]  -> single weighted class reduction
    w = jnp.where(col == label, base + (1.0 - eps), base)       # (TB, K)

    m = jnp.max(x, axis=1, keepdims=True)                       # (TB, 1)
    lse = jnp.log(jnp.sum(jnp.exp(x - m), axis=1, keepdims=True))   # (TB, 1)
    wsum = jnp.sum(w * x, axis=1, keepdims=True)                # (TB, 1)

    # loss = m + lse - [(1-eps)*x_label + (eps/K)*sum(x)]
    loss_ref[...] = m + lse - wsum


def cross_entropy_label_smooth(logits, targets, *, num_classes,
                               epsilon=0.1, reduction=True):
    """logits: (B, K) float (f32 or bf16, used as-is); targets: (B,) int class indices."""
    B, K = logits.shape
    assert K == num_classes, "num_classes must match logits' last dim"

    itemsize = jnp.dtype(logits.dtype).itemsize
    tb, vmem_limit = _tile_rows(B, K, itemsize)
    grid = _cdiv(B, tb)

    labels2d = targets.astype(jnp.int32).reshape(B, 1)

    per_sample = pl.pallas_call(
        partial(_ce_label_smooth_kernel,
                epsilon=float(epsilon), num_classes=num_classes),
        grid=(grid,),
        # Output sized to grid*tb so output blocks are never ragged; inputs stay
        # unpadded (the trailing input block is masked by Pallas).
        out_shape=jax.ShapeDtypeStruct((grid * tb, 1), jnp.float32),
        in_specs=[
            pl.BlockSpec((tb, K), lambda i: (i, 0)),   # logits tile (double-buffered DMA)
            pl.BlockSpec((tb, 1), lambda i: (i, 0)),   # labels tile
        ],
        out_specs=pl.BlockSpec((tb, 1), lambda i: (i, 0)),
        compiler_params=pltpu.CompilerParams(
            dimension_semantics=("parallel",),
            vmem_limit_bytes=int(vmem_limit),
        ),
        cost_estimate=pl.CostEstimate(
            flops=6 * B * K,
            transcendentals=B * K,
            bytes_accessed=B * K * itemsize + 8 * B,
        ),
    )(logits, labels2d)

    loss = per_sample[:B, 0]                 # drop rows >= B (ragged-block garbage)
    return jnp.mean(loss) if reduction else loss


def _reference(logits, targets, num_classes, epsilon, reduction):
    log_probs = jax.nn.log_softmax(logits.astype(jnp.float32), axis=1)
    onehot = jax.nn.one_hot(targets, num_classes, dtype=jnp.float32)
    smooth = (1.0 - epsilon) * onehot + epsilon / num_classes
    loss = jnp.sum(-smooth * log_probs, axis=1)
    return jnp.mean(loss) if reduction else loss


if __name__ == "__main__":
    eps = 0.1
    key = jax.random.PRNGKey(0)

    # Case 1: B = 8, K = 32 (single full tile)
    B, K = 8, 32
    k_logits, k_tgt, key = jax.random.split(key, 3)
    logits = jax.random.normal(k_logits, (B, K), dtype=jnp.float32)
    targets = jax.random.randint(k_tgt, (B,), 0, K, dtype=jnp.int32)

    loss = cross_entropy_label_smooth(logits, targets, num_classes=K,
                                      epsilon=eps, reduction=True)
    loss = jax.block_until_ready(loss)
    ref = _reference(logits, targets, K, eps, True)
    assert jnp.allclose(loss, ref, rtol=1e-5, atol=1e-5), (loss, ref)

    loss_vec = cross_entropy_label_smooth(logits, targets, num_classes=K,
                                          epsilon=eps, reduction=False)
    loss_vec = jax.block_until_ready(loss_vec)
    ref_vec = _reference(logits, targets, K, eps, False)
    assert jnp.allclose(loss_vec, ref_vec, rtol=1e-5, atol=1e-5)

    # Case 2: B = 13 (2-step grid, ragged unpadded last block, wrapper-side mean over exactly B)
    B2, K2 = 13, 32
    k_logits2, k_tgt2, key = jax.random.split(key, 3)
    logits2 = jax.random.normal(k_logits2, (B2, K2), dtype=jnp.float32)
    targets2 = jax.random.randint(k_tgt2, (B2,), 0, K2, dtype=jnp.int32)

    loss2 = cross_entropy_label_smooth(logits2, targets2, num_classes=K2,
                                       epsilon=eps, reduction=True)
    loss2 = jax.block_until_ready(loss2)
    ref2 = _reference(logits2, targets2, K2, eps, True)
    assert jnp.allclose(loss2, ref2, rtol=1e-5, atol=1e-5), (loss2, ref2)

    # Case 3: tiny batch B = 2 (block equals the full array dims)
    B3, K3 = 2, 32
    k_logits3, k_tgt3, key = jax.random.split(key, 3)
    logits3 = jax.random.normal(k_logits3, (B3, K3), dtype=jnp.float32)
    targets3 = jax.random.randint(k_tgt3, (B3,), 0, K3, dtype=jnp.int32)

    loss3 = cross_entropy_label_smooth(logits3, targets3, num_classes=K3,
                                       epsilon=eps, reduction=False)
    loss3 = jax.block_until_ready(loss3)
    ref3 = _reference(logits3, targets3, K3, eps, False)
    assert jnp.allclose(loss3, ref3, rtol=1e-5, atol=1e-5), (loss3, ref3)

    print("KERNEL_OK")
</pallas_src>

<mosaic_0001>
module attributes {stable_mosaic.version = 11 : i64} {
  func.func @_ce_label_smooth_kernel(%arg0: i32, %arg1: memref<8x32xf32, #tpu.memory_space<vmem>>, %arg2: memref<8x1xi32, #tpu.memory_space<vmem>>, %arg3: memref<8x1xf32, #tpu.memory_space<vmem>>) attributes {dimension_semantics = [#tpu.dimension_semantics<parallel>], iteration_bounds = array<i64: 1>, scalar_prefetch = 0 : i64, scratch_operands = 0 : i64, tpu.core_type = #tpu.core_type<tc>, window_params = [{transform_indices = @transform_0, window_bounds = array<i64: 8, 32>}, {transform_indices = @transform_1, window_bounds = array<i64: 8, 1>}, {transform_indices = @transform_2, window_bounds = array<i64: 8, 1>}]} {
    %c0 = arith.constant 0 : index
    %c0_0 = arith.constant 0 : index
    %0 = vector.load %arg1[%c0, %c0_0] : memref<8x32xf32, #tpu.memory_space<vmem>>, vector<8x32xf32>
    %cst = arith.constant 1.000000e-01 : f32
    %cst_1 = arith.constant 3.200000e+01 : f32
    %1 = arith.divf %cst, %cst_1 : f32
    %c0_2 = arith.constant 0 : index
    %c0_3 = arith.constant 0 : index
    %2 = vector.load %arg2[%c0_2, %c0_3] : memref<8x1xi32, #tpu.memory_space<vmem>>, vector<8x1xi32>
    %3 = tpu.iota {dimensions = array<i32: 1>} : vector<1x32xi32>
    %4 = vector.broadcast %3 : vector<1x32xi32> to vector<8x32xi32>
    %5 = vector.broadcast %2 : vector<8x1xi32> to vector<8x32xi32>
    %6 = arith.cmpi eq, %4, %5 : vector<8x32xi32>
    %cst_4 = arith.constant 1.000000e+00 : f32
    %cst_5 = arith.constant 1.000000e-01 : f32
    %7 = arith.subf %cst_4, %cst_5 : f32
    %8 = arith.addf %1, %7 : f32
    %9 = vector.broadcast %8 : f32 to vector<8x32xf32>
    %10 = vector.broadcast %1 : f32 to vector<8x32xf32>
    %11 = arith.select %6, %9, %10 : vector<8x32xi1>, vector<8x32xf32>
    %cst_6 = arith.constant dense<0xFF800000> : vector<8xf32>
    %12 = vector.multi_reduction <maximumf>, %0, %cst_6 [1] : vector<8x32xf32> to vector<8xf32>
    %13 = vector.shape_cast %12 : vector<8xf32> to vector<8x1xf32>
    %14 = vector.broadcast %13 : vector<8x1xf32> to vector<8x32xf32>
    %15 = arith.subf %0, %14 : vector<8x32xf32>
    %16 = math.exp %15 : vector<8x32xf32>
    %cst_7 = arith.constant dense<0.000000e+00> : vector<8xf32>
    %17 = vector.multi_reduction <add>, %16, %cst_7 [1] : vector<8x32xf32> to vector<8xf32>
    %18 = vector.shape_cast %17 : vector<8xf32> to vector<8x1xf32>
    %19 = math.log %18 : vector<8x1xf32>
    %20 = arith.mulf %11, %0 : vector<8x32xf32>
    %cst_8 = arith.constant dense<0.000000e+00> : vector<8xf32>
    %21 = vector.multi_reduction <add>, %20, %cst_8 [1] : vector<8x32xf32> to vector<8xf32>
    %22 = vector.shape_cast %21 : vector<8xf32> to vector<8x1xf32>
    %23 = arith.addf %13, %19 : vector<8x1xf32>
    %24 = arith.subf %23, %22 : vector<8x1xf32>
    %c0_9 = arith.constant 0 : index
    %c0_10 = arith.constant 0 : index
    %25 = vector.load %arg3[%c0_9, %c0_10] : memref<8x1xf32, #tpu.memory_space<vmem>>, vector<8x1xf32>
    tpu.vector_store %arg3[%c0_9, %c0_10], %24 {strides = array<i32>} : memref<8x1xf32, #tpu.memory_space<vmem>>, vector<8x1xf32>,
    return
  }
  func.func @transform_0(%arg0: i32) -> (i32, i32) {
    %c0_i32 = arith.constant 0 : i32
    %c0_i32_0 = arith.constant 0 : i32
    return %arg0, %c0_i32 : i32, i32
  }
  func.func @transform_1(%arg0: i32) -> (i32, i32) {
    %c0_i32 = arith.constant 0 : i32
    %c0_i32_0 = arith.constant 0 : i32
    return %arg0, %c0_i32 : i32, i32
  }
  func.func @transform_2(%arg0: i32) -> (i32, i32) {
    %c0_i32 = arith.constant 0 : i32
    %c0_i32_0 = arith.constant 0 : i32
    return %arg0, %c0_i32 : i32, i32
  }
}

</mosaic_0001>

<llo_original>
// kernel: tpu_custom_call.1
$region0: #{tpu_custom_call.1}
  #allocation0 [shape = 'u32[]', space=smem, size = 0x4, offset = 0x4, fixed_abs, tag = 'smem constant byte address 0x4 - core index']
  #allocation1 [shape = 'u32[144,128]{1,0:T(1,128)}', space=vmem, size = 0x12000, scoped, tag = 'internal scratch']
  %s0 = inlined_call_operand.vmem [shape: f32[8,32], index: 0, kind: input, shape index: {}]
  %s1 = inlined_call_operand.vmem [shape: s32[8,1], index: 1, kind: input, shape index: {}]
  %s2 = inlined_call_operand.vmem [shape: f32[8,1], index: 2, kind: output, shape index: {}]
  %s3 = sld [smem:[#allocation0]]
  $region18: #{tpu_custom_call.1} parent=0
    _
  %s5 = ssub.s32 1, %s3
  %s6 = scalar_select 0, %s5, %s3
  // Predicated region
  $region2: #{tpu_custom_call.1} parent=0 // pred_check
    _
  $region3: #{tpu_custom_call.1} parent=0 // pred_check_branch
    %8 = sbr.rel (0) target = $region5
  $region4: #{tpu_custom_call.1} parent=0 // pred_region
    _
  $region5: #{tpu_custom_call.1} parent=0 // pred_fallthru
    _
  // Predicated region
  $region6: #{tpu_custom_call.1} parent=0 // pred_check
    _
  $region7: #{tpu_custom_call.1} parent=0 // pred_check_branch
    %10 = sbr.rel (0) target = $region9
  $region8: #{tpu_custom_call.1} parent=0 // pred_region
    _
  $region9: #{tpu_custom_call.1} parent=0 // pred_fallthru
    _
  %v11 = vld [vmem:[%s0] sm:$0xff]
  %v12 = vld [vmem:[%s1] sm:$0xff]
  %v13 = vlaneseq
  %v14 = vand.u32 %v13, 127
  %15 = vset.pattern.permute.xlu0 0
  %16 = vperm.xlu0 %15, %v12
  %v17 = vpop.permute.xlu0 %16
  %vm18 = vcmp.eq.s32.totalorder %v14, %v17
  %v19 = vsel %vm18, 0.903125, 0.003125
  %vm20 = vcmask 261120
  %v21 = vsel %vm20, %v11, -inf
  %22 = vmax.xlane.f32.xlu0 %v21
  %v23 = vpop.xlane.xlu0 %22
  %v24 = vsub.f32 %v11, %v23
  %v25 = vmul.f32 %v24, 1.442695
  %v26 = vpow.pop %v25
  %v27 = vsel %vm20, %v26, 0.0
  %28 = vadd.xlane.f32.xlu0 %v27
  %v29 = vpop.xlane.xlu0 %28
  %v30 = vlog2.pop %v29
  %v31 = vmul.f32 %v30, 0.6931472
  %v32 = vmul.f32 %v19, %v11
  %v33 = vsel %vm20, %v32, 0.0
  %34 = vadd.xlane.f32.xlu0 %v33
  %v35 = vpop.xlane.xlu0 %34
  %v36 = vadd.f32 %v23, %v31
  %v37 = vsub.f32 %v36, %v35
  %vm38 = vcmask 7168
  %39 = vst.msk [vmem:[%s2] sm:$0xff] %vm38, %v37
  // Predicated region
  $region10: #{tpu_custom_call.1} parent=0 // pred_check
    _
  $region11: #{tpu_custom_call.1} parent=0 // pred_check_branch
    %41 = sbr.rel (0) target = $region13
  $region12: #{tpu_custom_call.1} parent=0 // pred_region
    _
  $region13: #{tpu_custom_call.1} parent=0 // pred_fallthru
    _
  // Predicated region
  $region14: #{tpu_custom_call.1} parent=0 // pred_check
    _
  $region15: #{tpu_custom_call.1} parent=0 // pred_check_branch
    %43 = sbr.rel (0) target = $region17
  $region16: #{tpu_custom_call.1} parent=0 // pred_region
    _
  $region17: #{tpu_custom_call.1} parent=0 // pred_fallthru
    _

</llo_original>
